<compile_context>
chip_gen: v7x
topology: tpu7x:2x2x1
jax: 0.10.0
libtpu: 0.0.40
codegen_flags: <defaults>
</compile_context>

<pallas_src>
import functools

import jax
import jax.numpy as jnp
from jax.experimental import pallas as pl
from jax.experimental.pallas import tpu as pltpu

NUM_METERS = 10
# CrossEntropyLoss class weights from the module __init__
CE_WEIGHTS = jnp.array([1.0, 1.5, 2.5, 5.0, 5.0, 7.0, 2.5, 7.0, 7.0, 0.0],
                       dtype=jnp.float32)


def _round_up(x, m):
    return ((x + m - 1) // m) * m


def _meter_head_kernel(x_ref, w_ref, consts_ref, ids_ref, sm_ref, part_ref, *,
                       num_classes, batch_size):
    # x_ref:      (TB, H)      f32   CLS hidden states for this batch tile
    # w_ref:      (H, CP)      f32   classifier weight, zero-padded to CP=128 classes
    # consts_ref: (8, CP)      f32   row 0 = bias (pad lanes = -1e30), row 1 = CE weights (pad = 0)
    # ids_ref:    (TB, 1)      i32   targets (rows >= batch_size are unspecified -> masked)
    # sm_ref:     (TB, CP)     f32   softmax output (padded lanes = 0)
    # part_ref:   (1, 8, CP)   f32   lane 0 = weighted-NLL sum, lane 1 = weight sum
    x = x_ref[...]
    w = w_ref[...]
    bias = consts_ref[0:1, :]        # (1, CP)
    cw = consts_ref[1:2, :]          # (1, CP)

    logits = jnp.dot(x, w, preferred_element_type=jnp.float32) + bias   # (TB, CP)

    # softmax over classes; padded lanes have logit ~ -1e30 -> exp -> 0
    m = jnp.max(logits, axis=1, keepdims=True)
    e = jnp.exp(logits - m)
    sm = e * pl.reciprocal(jnp.sum(e, axis=1, keepdims=True), approx=False)
    sm_ref[...] = sm

    tb, cp = sm.shape
    col = jax.lax.broadcasted_iota(jnp.int32, (tb, cp), 1)
    lane_valid = col < num_classes

    # CrossEntropyLoss applied to the *softmaxed* values (faithful to the PyTorch code).
    # sm is in [0, 1] so no max-subtraction is needed before exp; mask padded lanes.
    lse = jnp.log(jnp.sum(jnp.where(lane_valid, jnp.exp(sm), 0.0),
                          axis=1, keepdims=True))                       # (TB, 1)

    is_tgt = col == ids_ref[...]                                        # (TB, CP) bool
    picked = jnp.sum(jnp.where(is_tgt, sm, 0.0), axis=1, keepdims=True)  # (TB, 1)
    w_tgt = jnp.sum(jnp.where(is_tgt, cw, 0.0), axis=1, keepdims=True)   # (TB, 1)

    # Rows beyond the real batch (partial last block) may hold garbage (even NaN/Inf);
    # gate both the numerator term and the denominator weight with a row mask.
    row = pl.program_id(0) * tb + jax.lax.broadcasted_iota(jnp.int32, (tb, 1), 0)
    row_valid = row < batch_size                                         # (TB, 1)

    term = w_tgt * (lse - picked)                                        # (TB, 1)
    num = jnp.sum(jnp.where(row_valid, term, 0.0))   # weighted-NLL partial numerator
    den = jnp.sum(jnp.where(row_valid, w_tgt, 0.0))  # weight-sum partial denominator

    lane = jax.lax.broadcasted_iota(jnp.int32, (8, cp), 1)
    part_ref[...] = jnp.where(lane == 0, num,
                              jnp.where(lane == 1, den, 0.0))[None]


def meter_validator_forward(last_hidden, metre_ids, mlm_loss, w, b, *, tb_max=1024):
    """last_hidden: (B, S, H) f32, metre_ids: (B,) i32, mlm_loss: scalar f32,
    w: (H, C) f32 (Linear weight stored transposed), b: (C,) f32.
    Returns (softmaxed (B, C), total_loss scalar)."""
    B, S, H = last_hidden.shape
    C = w.shape[1]
    assert C <= CE_WEIGHTS.shape[0], "more classes than CE weights in the module"
    C_PAD = _round_up(max(C, 128), 128)

    # Fold CLS extraction into the pallas_call: a free (B, S*H) reshape lets the
    # BlockSpec DMA only the leading H lanes of each row (= the CLS vector).
    # No batch padding: the grid uses a partial last block instead.
    if H % 128 == 0:
        x2d = last_hidden.reshape(B, S * H)
    else:
        x2d = last_hidden[:, 0, :]  # fallback when H is not lane-aligned

    ids = metre_ids.astype(jnp.int32).reshape(B, 1)

    w_pad = jnp.pad(w.astype(jnp.float32), ((0, 0), (0, C_PAD - C)))
    consts = jnp.zeros((8, C_PAD), jnp.float32)
    consts = consts.at[0].set(jnp.pad(b.astype(jnp.float32), (0, C_PAD - C),
                                      constant_values=-1e30))
    consts = consts.at[1, :C].set(CE_WEIGHTS[:C])

    # Tile-size selection:
    #  * aim for >= 2 grid steps (when B allows) so v7x's two TensorCores both get work,
    #  * cap by a conservative VMEM budget so v5e's 16 MiB scoped default is safe,
    #  * set an explicit vmem_limit_bytes with headroom.
    tb_target = min(tb_max, _round_up(max(pl.cdiv(B, 2), 1), 8))
    per_row = 2 * H * 4 + 2 * C_PAD * 4 + 2 * 4          # x, sm, ids (double-buffered)
    fixed = 2 * H * C_PAD * 4 + 2 * 8 * C_PAD * 4 + 2 * 8 * C_PAD * 4   # w, consts, partials
    vmem_budget = 12 * 1024 * 1024
    tb_cap = max(8, ((vmem_budget - fixed) // per_row) // 8 * 8)
    TB = int(max(8, min(tb_target, tb_cap)))
    num_tiles = pl.cdiv(B, TB)

    footprint = fixed + TB * per_row
    vmem_limit = int(min(48 * 1024 * 1024, max(2 * footprint, 16 * 1024 * 1024)))

    kernel = functools.partial(_meter_head_kernel, num_classes=C, batch_size=B)
    sm_pad, partials = pl.pallas_call(
        kernel,
        grid=(num_tiles,),
        in_specs=[
            pl.BlockSpec((TB, H), lambda i: (i, 0)),            # CLS slab per batch tile
            pl.BlockSpec((H, C_PAD), lambda i: (0, 0)),         # weight (grid-invariant)
            pl.BlockSpec((8, C_PAD), lambda i: (0, 0)),         # bias + CE weights
            pl.BlockSpec((TB, 1), lambda i: (i, 0)),            # targets
        ],
        out_specs=(
            pl.BlockSpec((TB, C_PAD), lambda i: (i, 0)),        # lane-dense softmax output
            pl.BlockSpec((1, 8, C_PAD), lambda i: (i, 0, 0)),   # per-tile partial sums
        ),
        out_shape=(
            jax.ShapeDtypeStruct((B, C_PAD), jnp.float32),
            jax.ShapeDtypeStruct((num_tiles, 8, C_PAD), jnp.float32),
        ),
        compiler_params=pltpu.CompilerParams(
            dimension_semantics=("parallel",),
            vmem_limit_bytes=vmem_limit),
    )(x2d, w_pad, consts, ids)

    sm = sm_pad[:, :C]
    num = jnp.sum(partials[:, 0, 0])
    den = jnp.sum(partials[:, 0, 1])
    # Faithful to PyTorch weighted-mean CE: divides by the sum of target weights
    # (NaN if every target has weight 0, same as the original module).
    meter_loss = num / den
    total_loss = meter_loss + jnp.asarray(mlm_loss, jnp.float32)
    return sm, total_loss


def _reference(last_hidden, metre_ids, mlm_loss, w, b):
    cls = last_hidden[:, 0, :]
    logits = cls @ w + b
    sm = jax.nn.softmax(logits, axis=1)
    lse = jax.nn.logsumexp(sm, axis=1)
    picked = sm[jnp.arange(sm.shape[0]), metre_ids]
    w_t = CE_WEIGHTS[metre_ids]
    meter_loss = jnp.sum(w_t * (lse - picked)) / jnp.sum(w_t)
    return sm, meter_loss + mlm_loss


if __name__ == "__main__":
    B, S, H, C = 2, 8, 128, NUM_METERS
    key = jax.random.PRNGKey(0)
    k1, k2, k3, k4 = jax.random.split(key, 4)

    last_hidden = jax.random.normal(k1, (B, S, H), dtype=jnp.float32)
    metre_ids = jax.random.randint(k2, (B,), 0, C - 1, dtype=jnp.int32)
    mlm_loss = jnp.float32(1.234)  # stands in for outputs.loss of the MLM backbone
    # deterministic Linear(H, C) init (weight stored transposed: (H, C))
    w = (jax.random.normal(k3, (H, C), dtype=jnp.float32) / jnp.sqrt(H)).astype(jnp.float32)
    b = (jax.random.normal(k4, (C,), dtype=jnp.float32) * 0.01).astype(jnp.float32)

    sm, loss = jax.jit(meter_validator_forward)(last_hidden, metre_ids, mlm_loss, w, b)
    jax.block_until_ready((sm, loss))

    sm_ref, loss_ref = _reference(last_hidden, metre_ids, mlm_loss, w, b)
    assert jnp.allclose(sm, sm_ref, atol=1e-5), "softmax mismatch"
    assert jnp.allclose(loss, loss_ref, atol=1e-5), "loss mismatch"

    # TODO(synk): the AutoModelForMaskedLM backbone itself is not reimplemented;
    # its last_hidden state and scalar loss are taken as kernel inputs.
    print("KERNEL_OK")
</pallas_src>

<mosaic_0001>
module attributes {stable_mosaic.version = 11 : i64} {
  func.func @_meter_head_kernel(%arg0: i32, %arg1: memref<8x128xf32, #tpu.memory_space<vmem>>, %arg2: memref<128x128xf32, #tpu.memory_space<vmem>>, %arg3: memref<8x128xf32, #tpu.memory_space<vmem>>, %arg4: memref<8x1xi32, #tpu.memory_space<vmem>>, %arg5: memref<8x128xf32, #tpu.memory_space<vmem>>, %arg6: memref<1x8x128xf32, #tpu.memory_space<vmem>>) attributes {dimension_semantics = [#tpu.dimension_semantics<parallel>], iteration_bounds = array<i64: 1>, scalar_prefetch = 0 : i64, scratch_operands = 0 : i64, tpu.core_type = #tpu.core_type<tc>, window_params = [{transform_indices = @transform_0, window_bounds = array<i64: 8, 128>}, {pipeline_mode = #tpu.pipeline_mode<synchronous>, transform_indices = @transform_1, window_bounds = array<i64: 128, 128>}, {pipeline_mode = #tpu.pipeline_mode<synchronous>, transform_indices = @transform_2, window_bounds = array<i64: 8, 128>}, {transform_indices = @transform_3, window_bounds = array<i64: 8, 1>}, {transform_indices = @transform_4, window_bounds = array<i64: 8, 128>}, {transform_indices = @transform_5, window_bounds = array<i64: 1, 8, 128>}]} {
    %c0 = arith.constant 0 : index
    %c0_0 = arith.constant 0 : index
    %0 = vector.load %arg1[%c0, %c0_0] : memref<8x128xf32, #tpu.memory_space<vmem>>, vector<8x128xf32>
    %c0_1 = arith.constant 0 : index
    %c0_2 = arith.constant 0 : index
    %1 = vector.load %arg2[%c0_1, %c0_2] : memref<128x128xf32, #tpu.memory_space<vmem>>, vector<128x128xf32>
    %c0_3 = arith.constant 0 : index
    %c0_4 = arith.constant 0 : index
    %2 = vector.load %arg3[%c0_3, %c0_4] : memref<8x128xf32, #tpu.memory_space<vmem>>, vector<1x128xf32>
    %c1 = arith.constant 1 : index
    %c0_5 = arith.constant 0 : index
    %3 = vector.load %arg3[%c1, %c0_5] : memref<8x128xf32, #tpu.memory_space<vmem>>, vector<1x128xf32>
    %cst = arith.constant dense<0.000000e+00> : vector<8x128xf32>
    %4 = tpu.matmul %0, %1, %cst {dimension_numbers = #tpu.dot_dimension_numbers<[1], [0], [0], [1], [0, 0, 1, 1], [], []>} : vector<8x128xf32>, vector<128x128xf32>, vector<8x128xf32> -> vector<8x128xf32>
    %5 = vector.broadcast %2 : vector<1x128xf32> to vector<8x128xf32>
    %6 = arith.addf %4, %5 : vector<8x128xf32>
    %cst_6 = arith.constant dense<0xFF800000> : vector<8xf32>
    %7 = vector.multi_reduction <maximumf>, %6, %cst_6 [1] : vector<8x128xf32> to vector<8xf32>
    %8 = vector.shape_cast %7 : vector<8xf32> to vector<8x1xf32>
    %9 = vector.broadcast %8 : vector<8x1xf32> to vector<8x128xf32>
    %10 = arith.subf %6, %9 : vector<8x128xf32>
    %11 = math.exp %10 : vector<8x128xf32>
    %cst_7 = arith.constant dense<0.000000e+00> : vector<8xf32>
    %12 = vector.multi_reduction <add>, %11, %cst_7 [1] : vector<8x128xf32> to vector<8xf32>
    %13 = vector.shape_cast %12 : vector<8xf32> to vector<8x1xf32>
    %14 = tpu.reciprocal %13 : vector<8x1xf32> -> vector<8x1xf32>
    %15 = vector.broadcast %14 : vector<8x1xf32> to vector<8x128xf32>
    %16 = arith.mulf %11, %15 : vector<8x128xf32>
    %c0_8 = arith.constant 0 : index
    %c0_9 = arith.constant 0 : index
    %17 = vector.load %arg5[%c0_8, %c0_9] : memref<8x128xf32, #tpu.memory_space<vmem>>, vector<8x128xf32>
    tpu.vector_store %arg5[%c0_8, %c0_9], %16 {strides = array<i32>} : memref<8x128xf32, #tpu.memory_space<vmem>>, vector<8x128xf32>,
    %18 = tpu.iota {dimensions = array<i32: 1>} : vector<8x128xi32>
    %c10_i32 = arith.constant 10 : i32
    %19 = vector.broadcast %c10_i32 : i32 to vector<8x128xi32>
    %20 = arith.cmpi slt, %18, %19 : vector<8x128xi32>
    %21 = math.exp %16 : vector<8x128xf32>
    %cst_10 = arith.constant 0.000000e+00 : f32
    %22 = vector.broadcast %cst_10 : f32 to vector<8x128xf32>
    %23 = arith.select %20, %21, %22 : vector<8x128xi1>, vector<8x128xf32>
    %cst_11 = arith.constant dense<0.000000e+00> : vector<8xf32>
    %24 = vector.multi_reduction <add>, %23, %cst_11 [1] : vector<8x128xf32> to vector<8xf32>
    %25 = vector.shape_cast %24 : vector<8xf32> to vector<8x1xf32>
    %26 = math.log %25 : vector<8x1xf32>
    %c0_12 = arith.constant 0 : index
    %c0_13 = arith.constant 0 : index
    %27 = vector.load %arg4[%c0_12, %c0_13] : memref<8x1xi32, #tpu.memory_space<vmem>>, vector<8x1xi32>
    %28 = vector.broadcast %27 : vector<8x1xi32> to vector<8x128xi32>
    %29 = arith.cmpi eq, %18, %28 : vector<8x128xi32>
    %cst_14 = arith.constant 0.000000e+00 : f32
    %30 = vector.broadcast %cst_14 : f32 to vector<8x128xf32>
    %31 = arith.select %29, %16, %30 : vector<8x128xi1>, vector<8x128xf32>
    %cst_15 = arith.constant dense<0.000000e+00> : vector<8xf32>
    %32 = vector.multi_reduction <add>, %31, %cst_15 [1] : vector<8x128xf32> to vector<8xf32>
    %33 = vector.shape_cast %32 : vector<8xf32> to vector<8x1xf32>
    %cst_16 = arith.constant 0.000000e+00 : f32
    %34 = vector.shape_cast %3 : vector<1x128xf32> to vector<1x128xf32>
    %35 = vector.broadcast %34 : vector<1x128xf32> to vector<8x128xf32>
    %36 = vector.broadcast %cst_16 : f32 to vector<8x128xf32>
    %37 = arith.select %29, %35, %36 : vector<8x128xi1>, vector<8x128xf32>
    %cst_17 = arith.constant dense<0.000000e+00> : vector<8xf32>
    %38 = vector.multi_reduction <add>, %37, %cst_17 [1] : vector<8x128xf32> to vector<8xf32>
    %39 = vector.shape_cast %38 : vector<8xf32> to vector<8x1xf32>
    %c8_i32 = arith.constant 8 : i32
    %40 = arith.muli %arg0, %c8_i32 : i32
    %41 = tpu.iota {dimensions = array<i32: 0>} : vector<8x1xi32>
    %42 = vector.broadcast %40 : i32 to vector<8x1xi32>
    %43 = arith.addi %42, %41 : vector<8x1xi32>
    %c2_i32 = arith.constant 2 : i32
    %44 = vector.broadcast %c2_i32 : i32 to vector<8x1xi32>
    %45 = arith.cmpi slt, %43, %44 : vector<8x1xi32>
    %46 = arith.subf %26, %33 : vector<8x1xf32>
    %47 = arith.mulf %39, %46 : vector<8x1xf32>
    %cst_18 = arith.constant 0.000000e+00 : f32
    %48 = vector.broadcast %cst_18 : f32 to vector<8x1xf32>
    %49 = arith.select %45, %47, %48 : vector<8x1xi1>, vector<8x1xf32>
    %50 = vector.shape_cast %49 : vector<8x1xf32> to vector<1x8x1xf32>
    %cst_19 = arith.constant dense<0.000000e+00> : vector<1xf32>
    %51 = vector.multi_reduction <add>, %50, %cst_19 [1, 2] : vector<1x8x1xf32> to vector<1xf32>
    %52 = vector.shape_cast %51 : vector<1xf32> to vector<1x1x1xf32>
    %53 = vector.extract %52[0, 0, 0] : f32 from vector<1x1x1xf32>
    %cst_20 = arith.constant 0.000000e+00 : f32
    %54 = vector.broadcast %cst_20 : f32 to vector<8x1xf32>
    %55 = arith.select %45, %39, %54 : vector<8x1xi1>, vector<8x1xf32>
    %56 = vector.shape_cast %55 : vector<8x1xf32> to vector<1x8x1xf32>
    %cst_21 = arith.constant dense<0.000000e+00> : vector<1xf32>
    %57 = vector.multi_reduction <add>, %56, %cst_21 [1, 2] : vector<1x8x1xf32> to vector<1xf32>
    %58 = vector.shape_cast %57 : vector<1xf32> to vector<1x1x1xf32>
    %59 = vector.extract %58[0, 0, 0] : f32 from vector<1x1x1xf32>
    %60 = tpu.iota {dimensions = array<i32: 1>} : vector<8x128xi32>
    %c0_i32 = arith.constant 0 : i32
    %61 = vector.broadcast %c0_i32 : i32 to vector<8x128xi32>
    %62 = arith.cmpi eq, %60, %61 : vector<8x128xi32>
    %c1_i32 = arith.constant 1 : i32
    %63 = vector.broadcast %c1_i32 : i32 to vector<8x128xi32>
    %64 = arith.cmpi eq, %60, %63 : vector<8x128xi32>
    %cst_22 = arith.constant 0.000000e+00 : f32
    %65 = vector.broadcast %59 : f32 to vector<8x128xf32>
    %66 = vector.broadcast %cst_22 : f32 to vector<8x128xf32>
    %67 = arith.select %64, %65, %66 : vector<8x128xi1>, vector<8x128xf32>
    %68 = vector.broadcast %53 : f32 to vector<8x128xf32>
    %69 = arith.select %62, %68, %67 : vector<8x128xi1>, vector<8x128xf32>
    %70 = vector.shape_cast %69 : vector<8x128xf32> to vector<1x8x128xf32>
    %c0_23 = arith.constant 0 : index
    %c0_24 = arith.constant 0 : index
    %c0_25 = arith.constant 0 : index
    %71 = vector.load %arg6[%c0_23, %c0_24, %c0_25] : memref<1x8x128xf32, #tpu.memory_space<vmem>>, vector<1x8x128xf32>
    tpu.vector_store %arg6[%c0_23, %c0_24, %c0_25], %70 {strides = array<i32>} : memref<1x8x128xf32, #tpu.memory_space<vmem>>, vector<1x8x128xf32>,
    return
  }
  func.func @transform_0(%arg0: i32) -> (i32, i32) {
    %c0_i32 = arith.constant 0 : i32
    %c0_i32_0 = arith.constant 0 : i32
    return %arg0, %c0_i32 : i32, i32
  }
  func.func @transform_1(%arg0: i32) -> (i32, i32) {
    %c0_i32 = arith.constant 0 : i32
    %c0_i32_0 = arith.constant 0 : i32
    %c0_i32_1 = arith.constant 0 : i32
    return %c0_i32, %c0_i32_0 : i32, i32
  }
  func.func @transform_2(%arg0: i32) -> (i32, i32) {
    %c0_i32 = arith.constant 0 : i32
    %c0_i32_0 = arith.constant 0 : i32
    %c0_i32_1 = arith.constant 0 : i32
    return %c0_i32, %c0_i32_0 : i32, i32
  }
  func.func @transform_3(%arg0: i32) -> (i32, i32) {
    %c0_i32 = arith.constant 0 : i32
    %c0_i32_0 = arith.constant 0 : i32
    return %arg0, %c0_i32 : i32, i32
  }
  func.func @transform_4(%arg0: i32) -> (i32, i32) {
    %c0_i32 = arith.constant 0 : i32
    %c0_i32_0 = arith.constant 0 : i32
    return %arg0, %c0_i32 : i32, i32
  }
  func.func @transform_5(%arg0: i32) -> (i32, i32, i32) {
    %c0_i32 = arith.constant 0 : i32
    %c0_i32_0 = arith.constant 0 : i32
    %c0_i32_1 = arith.constant 0 : i32
    return %arg0, %c0_i32, %c0_i32_0 : i32, i32, i32
  }
}

</mosaic_0001>

<llo_original>
// kernel: meter_validator_forward.1
$region0: #{meter_validator_forward.1}
  #allocation0 [shape = 'u32[]', space=smem, size = 0x4, offset = 0x4, fixed_abs, tag = 'smem constant byte address 0x4 - core index']
  #allocation1 [shape = 'u32[144,128]{1,0:T(1,128)}', space=vmem, size = 0x12000, scoped, tag = 'internal scratch']
  %s0 = inlined_call_operand.vmem [shape: f32[2,1024], index: 0, kind: input, shape index: {}]
  %s1 = inlined_call_operand.vmem [shape: f32[128,128], index: 1, kind: input, shape index: {}]
  %s2 = inlined_call_operand.vmem [shape: f32[8,128], index: 2, kind: input, shape index: {}]
  %s3 = inlined_call_operand.vmem [shape: s32[2,1], index: 3, kind: input, shape index: {}]
  %s4 = inlined_call_operand.hbm [shape: f32[2,128], index: 4, kind: output, shape index: {0}]
  %s5 = inlined_call_operand.vmem [shape: f32[1,8,128], index: 5, kind: output, shape index: {1}]
  %6 = xla_tuple %s4, %s5
  %s7 = sld [smem:[#allocation0]]
  $region68: #{meter_validator_forward.1} parent=0
    _
  %s9 = ssub.s32 1, %s7
  %s10 = scalar_select 0, %s9, %s7
  $region1: #{meter_validator_forward.1} parent=0
    #allocation2 [shape = 'u8[4096]{0}', space=vmem, size = 0x1000, scoped, tag = 'input window, operand 0, single buffered']
    #allocation3 [shape = 'u8[4096]{0}', space=vmem, size = 0x1000, scoped, tag = 'output window, operand 0, single buffered']
    #allocation4 [shape = 's32[1]{0}', space=sflag, size = 0x4, scoped, tag = 'scoped memory for meter_validator_forward.1']
    %11 = vsyncpa [#allocation4], 0
    // Predicated region
    $region2: #{meter_validator_forward.1} parent=1 // pred_check
      _
    $region3: #{meter_validator_forward.1} parent=1 // pred_check_branch
      %13 = sbr.rel (0) target = $region5
    $region4: #{meter_validator_forward.1} parent=1 // pred_region
      // Predicated region
      $region6: #{meter_validator_forward.1} parent=4 // pred_check
        _
      $region7: #{meter_validator_forward.1} parent=4 // pred_check_branch
        %15 = sbr.rel (0) target = $region9
      $region8: #{meter_validator_forward.1} parent=4 // pred_region
        // Predicated region
        $region10: #{meter_validator_forward.1} parent=8 // pred_check
          _
        $region11: #{meter_validator_forward.1} parent=8 // pred_check_branch
          %17 = sbr.rel target = $region13
        $region12: #{meter_validator_forward.1} parent=8 // pred_region
          // Predicated region
          $region25: #{meter_validator_forward.1} parent=12 // pred_check
            _
          $region26: #{meter_validator_forward.1} parent=12 // pred_check_branch
            %32 = sbr.rel (0) target = $region28
          $region27: #{meter_validator_forward.1} parent=12 // pred_region
            loop: start=0, step=1, limit=1
            $region29: #{meter_validator_forward.1} parent=27 // loop_pre_header
              _
            $region30: #{meter_validator_forward.1} parent=27 // loop_header
              %s35 = sphi 0, %s39
              %p36 = scmp.ge.s32.totalorder %s35, 1
              %s40 = sphi %s0, %s0
              %s41 = sphi [#allocation2], [#allocation2]
            $region31: #{meter_validator_forward.1} parent=27 // loop_header_branch
              %38 = sbr.rel (%p36) target = $region35
            $region32: #{meter_validator_forward.1} parent=27 // loop_body
              %v42 = vld [vmem:[%s40] sm:$0x3]
              %43 = vst [vmem:[%s41] sm:$0x3] %v42
            $region33: #{meter_validator_forward.1} parent=27 // loop_footer
              %s39 = sadd.s32 1, %s35
            $region34: #{meter_validator_forward.1} parent=27 // loop_footer_branch
              %34 = sbr.rel target = $region30
            $region35: #{meter_validator_forward.1} parent=27 // loop_exit
              _
          $region28: #{meter_validator_forward.1} parent=12 // pred_fallthru
            _
        $region13: #{meter_validator_forward.1} parent=8 // pred_fallthru
          _
        // Predicated region
        $region14: #{meter_validator_forward.1} parent=8 // pred_check
          _
        $region15: #{meter_validator_forward.1} parent=8 // pred_check_branch
          %19 = sbr.rel (0) target = $region17
        $region16: #{meter_validator_forward.1} parent=8 // pred_region
          loop: start=0, step=1, limit=1
          $region18: #{meter_validator_forward.1} parent=16 // loop_pre_header
            _
          $region19: #{meter_validator_forward.1} parent=16 // loop_header
            %s22 = sphi 0, %s26
            %p23 = scmp.ge.s32.totalorder %s22, 1
            %s27 = sphi %s0, %s0
            %s28 = sphi [#allocation2], [#allocation2]
          $region20: #{meter_validator_forward.1} parent=16 // loop_header_branch
            %25 = sbr.rel (%p23) target = $region24
          $region21: #{meter_validator_forward.1} parent=16 // loop_body
            %v29 = vld [vmem:[%s27] sm:$0x3]
            %30 = vst [vmem:[%s28] sm:$0x3] %v29
          $region22: #{meter_validator_forward.1} parent=16 // loop_footer
            %s26 = sadd.s32 1, %s22
          $region23: #{meter_validator_forward.1} parent=16 // loop_footer_branch
            %21 = sbr.rel target = $region19
          $region24: #{meter_validator_forward.1} parent=16 // loop_exit
            _
        $region17: #{meter_validator_forward.1} parent=8 // pred_fallthru
          _
      $region9: #{meter_validator_forward.1} parent=4 // pred_fallthru
        _
      %44 = vnop
    $region5: #{meter_validator_forward.1} parent=1 // pred_fallthru
      _
    // Predicated region
    $region36: #{meter_validator_forward.1} parent=1 // pred_check
      _
    $region37: #{meter_validator_forward.1} parent=1 // pred_check_branch
      %46 = sbr.rel (0) target = $region39
    $region38: #{meter_validator_forward.1} parent=1 // pred_region
      _
    $region39: #{meter_validator_forward.1} parent=1 // pred_fallthru
      _
    // Predicated region
    $region40: #{meter_validator_forward.1} parent=1 // pred_check
      _
    $region41: #{meter_validator_forward.1} parent=1 // pred_check_branch
      %48 = sbr.rel (0) target = $region43
    $region42: #{meter_validator_forward.1} parent=1 // pred_region
      _
    $region43: #{meter_validator_forward.1} parent=1 // pred_fallthru
      _
    // Predicated region
    $region44: #{meter_validator_forward.1} parent=1 // pred_check
      _
    $region45: #{meter_validator_forward.1} parent=1 // pred_check_branch
      %50 = sbr.rel (0) target = $region47
    $region46: #{meter_validator_forward.1} parent=1 // pred_region
      _
    $region47: #{meter_validator_forward.1} parent=1 // pred_fallthru
      _
    // Predicated region
    $region48: #{meter_validator_forward.1} parent=1 // pred_check
      _
    $region49: #{meter_validator_forward.1} parent=1 // pred_check_branch
      %52 = sbr.rel (0) target = $region51
    $region50: #{meter_validator_forward.1} parent=1 // pred_region
      _
    $region51: #{meter_validator_forward.1} parent=1 // pred_fallthru
      _
    %v53 = vld [vmem:[#allocation2] sm:$0xff]
    %v54 = vld [vmem:[%s1] sm:$0xff]
    %v55 = vld [vmem:[%s1 + $0x8] sm:$0xff]
    %v56 = vld [vmem:[%s1 + $0x10] sm:$0xff]
    %v57 = vld [vmem:[%s1 + $0x18] sm:$0xff]
    %v58 = vld [vmem:[%s1 + $0x20] sm:$0xff]
    %v59 = vld [vmem:[%s1 + $0x28] sm:$0xff]
    %v60 = vld [vmem:[%s1 + $0x30] sm:$0xff]
    %v61 = vld [vmem:[%s1 + $0x38] sm:$0xff]
    %v62 = vld [vmem:[%s1 + $0x40] sm:$0xff]
    %v63 = vld [vmem:[%s1 + $0x48] sm:$0xff]
    %v64 = vld [vmem:[%s1 + $0x50] sm:$0xff]
    %v65 = vld [vmem:[%s1 + $0x58] sm:$0xff]
    %v66 = vld [vmem:[%s1 + $0x60] sm:$0xff]
    %v67 = vld [vmem:[%s1 + $0x68] sm:$0xff]
    %v68 = vld [vmem:[%s1 + $0x70] sm:$0xff]
    %v69 = vld [vmem:[%s1 + $0x78] sm:$0xff]
    %v70 = vld [vmem:[%s2] sm:$0x1]
    %v71 = vld [vmem:[%s2 + $0x1] sm:$0x1]
    %v72 = vlaneseq
    %v73 = vshrl.u32 %v72, 7
    %v74 = vsub.s32 0, %v73
    %v75 = vrot.slane %v70, %v74
    %76 = vmatprep.subr.mxu0 0.0
    %77 = vmatpush1.msra.mxu0 %v54
    %78 = vmatprep.subr.mxu0 0.0
    %79 = vmatpush1.msra.mxu0 %v55
    %80 = vmatprep.subr.mxu0 0.0
    %81 = vmatpush1.msra.mxu0 %v56
    %82 = vmatprep.subr.mxu0 0.0
    %83 = vmatpush1.msra.mxu0 %v57
    %84 = vmatprep.subr.mxu0 0.0
    %85 = vmatpush1.msra.mxu0 %v58
    %86 = vmatprep.subr.mxu0 0.0
    %87 = vmatpush1.msra.mxu0 %v59
    %88 = vmatprep.subr.mxu0 0.0
    %89 = vmatpush1.msra.mxu0 %v60
    %90 = vmatprep.subr.mxu0 0.0
    %91 = vmatpush1.msra.mxu0 %v61
    %92 = vmatprep.subr.mxu0 0.0
    %93 = vmatpush1.msra.mxu0 %v62
    %94 = vmatprep.subr.mxu0 0.0
    %95 = vmatpush1.msra.mxu0 %v63
    %96 = vmatprep.subr.mxu0 0.0
    %97 = vmatpush1.msra.mxu0 %v64
    %98 = vmatprep.subr.mxu0 0.0
    %99 = vmatpush1.msra.mxu0 %v65
    %100 = vmatprep.subr.mxu0 0.0
    %101 = vmatpush1.msra.mxu0 %v66
    %102 = vmatprep.subr.mxu0 0.0
    %103 = vmatpush1.msra.mxu0 %v67
    %104 = vmatprep.subr.mxu0 0.0
    %105 = vmatpush1.msra.mxu0 %v68
    %106 = vmatprep.subr.mxu0 0.0
    %107 = vmatpush1.msra.mxu0 %v69
    %108 = vmatprep.subr.mxu0 0.0
    %109 = vmatpush1.msra.mxu0 0.0
    %110 = vmatprep.subr.mxu0 0.0
    %111 = vmatpush1.msra.mxu0 0.0
    %112 = vmatprep.subr.mxu0 0.0
    %113 = vmatpush1.msra.mxu0 0.0
    %114 = vmatprep.subr.mxu0 0.0
    %115 = vmatpush1.msra.mxu0 0.0
    %116 = vmatprep.subr.mxu0 0.0
    %117 = vmatpush1.msra.mxu0 0.0
    %118 = vmatprep.subr.mxu0 0.0
    %119 = vmatpush1.msra.mxu0 0.0
    %120 = vmatprep.subr.mxu0 0.0
    %121 = vmatpush1.msra.mxu0 0.0
    %122 = vmatprep.subr.mxu0 0.0
    %123 = vmatpush1.msra.mxu0 0.0
    %124 = vmatprep.subr.mxu0 0.0
    %125 = vmatpush1.msra.mxu0 0.0
    %126 = vmatprep.subr.mxu0 0.0
    %127 = vmatpush1.msra.mxu0 0.0
    %128 = vmatprep.subr.mxu0 0.0
    %129 = vmatpush1.msra.mxu0 0.0
    %130 = vmatprep.subr.mxu0 0.0
    %131 = vmatpush1.msra.mxu0 0.0
    %132 = vmatprep.subr.mxu0 0.0
    %133 = vmatpush1.msra.mxu0 0.0
    %134 = vmatprep.subr.mxu0 0.0
    %135 = vmatpush1.msra.mxu0 0.0
    %136 = vmatprep.subr.mxu0 0.0
    %137 = vmatpush1.msra.mxu0 0.0
    %138 = vmatprep.subr.mxu0 0.0
    %139 = vmatpush1.msra.mxu0 0.0
    %140 = vmatprep.mubr.f32.mxu0 0.0
    %141 = vmatmul.mubr.f32.gmra.mrb[0].mxu0 %v53
    %v142 = vpop.f32.mrb[0].mxu0
    %v143 = vadd.f32 %v75, %v142
    %v144 = vpop.f32.mrb[0].mxu0
    %145 = vdwg.mxu0
    %146 = vmax.xlane.f32.xlu0 %v143
    %v147 = vpop.xlane.xlu0 %146
    %v148 = vsub.f32 %v143, %v147
    %v149 = vmul.f32 %v148, 1.442695
    %v150 = vpow.pop %v149
    %151 = vadd.xlane.f32.xlu0 %v150
    %v152 = vpop.xlane.xlu0 %151
    %v153 = vrcp.pop %v152
    %v154 = vmul.f32 %v150, %v153
    %155 = vst [vmem:[#allocation3] sm:$0xff] %v154
    %v156 = vlaneseq
    %v157 = vand.u32 %v156, 127
    %vm158 = vcmp.lt.s32.totalorder %v157, 10
    %v159 = vmul.f32 %v154, 1.442695
    %v160 = vpow.pop %v159
    %v161 = vsel %vm158, %v160, 0.0
    %162 = vadd.xlane.f32.xlu0 %v161
    %v163 = vpop.xlane.xlu0 %162
    %v164 = vlog2.pop %v163
    %v165 = vmul.f32 %v164, 0.6931472
    %v166 = vld [vmem:[%s3] sm:$0xff]
    %167 = vset.pattern.permute.xlu0 0
    %168 = vperm.xlu0 %167, %v166
    %v169 = vpop.permute.xlu0 %168
    %vm170 = vcmp.eq.s32.totalorder %v157, %v169
    %v171 = vsel %vm170, %v154, 0.0
    %172 = vadd.xlane.f32.xlu0 %v171
    %v173 = vpop.xlane.xlu0 %172
    %v174 = vlaneseq
    %v175 = vshrl.u32 %v174, 7
    %v176 = vsub.s32 0, %v175
    %v177 = vrot.slane %v71, %v176
    %v178 = vsel %vm170, %v177, 0.0
    %179 = vadd.xlane.f32.xlu0 %v178
    %v180 = vpop.xlane.xlu0 %179
    %s181 = smul.u32 0, 8
    %v182 = vlaneseq
    %v183 = vshrl.u32 %v182, 7
    %v184 = vstv %s181
    %v185 = vadd.s32 %v184, %v183
    %vm186 = vcmp.lt.s32.totalorder %v185, 2
    %v187 = vsub.f32 %v165, %v173
    %v188 = vmul.f32 %v180, %v187
    %v189 = vsel %vm186, %v188, 0.0
    %vm190 = vcmask 7168
    %v191 = vsel %vm190, %v189, 0.0
    %192 = vadd.xlane.f32.xlu0 %v191
    %v193 = vpop.xlane.xlu0 %192
    %v194 = vrot.slane %v193, 4
    %v195 = vadd.f32 %v193, %v194
    %v196 = vrot.slane %v195, 2
    %v197 = vadd.f32 %v195, %v196
    %v198 = vrot.slane %v197, 1
    %v199 = vadd.f32 %v197, %v198
    %s200 = vtos %v199
    %v201 = vsel %vm186, %v180, 0.0
    %v202 = vsel %vm190, %v201, 0.0
    %203 = vadd.xlane.f32.xlu0 %v202
    %v204 = vpop.xlane.xlu0 %203
    %v205 = vrot.slane %v204, 4
    %v206 = vadd.f32 %v204, %v205
    %v207 = vrot.slane %v206, 2
    %v208 = vadd.f32 %v206, %v207
    %v209 = vrot.slane %v208, 1
    %v210 = vadd.f32 %v208, %v209
    %s211 = vtos %v210
    %vm212 = vcmp.eq.s32.totalorder %v157, 0
    %vm213 = vcmp.eq.s32.totalorder %v157, 1
    %v214 = vstv %s211
    %v215 = vsel %vm213, %v214, 0.0
    %v216 = vstv %s200
    %v217 = vsel %vm212, %v216, %v215
    %218 = vst [vmem:[%s5] sm:$0xff] %v217
    // Predicated region
    $region52: #{meter_validator_forward.1} parent=1 // pred_check
      _
    $region53: #{meter_validator_forward.1} parent=1 // pred_check_branch
      %220 = sbr.rel (0) target = $region55
    $region54: #{meter_validator_forward.1} parent=1 // pred_region
      %s222 = ssub.s32 128, 32
      %223 = vsyncadd [#allocation4], %s222
      %s224 = sshll.u32 [#allocation3], 4
      %s225 = int_to_ptr.vmem [resolvable:$true] %s224
      %230 = dma.vmem_to_hbm [thread:$0]  %s225, 32, %s4, [#allocation4], 32, 32, 2
    $region55: #{meter_validator_forward.1} parent=1 // pred_fallthru
      _
    // Predicated region
    $region56: #{meter_validator_forward.1} parent=1 // pred_check
      _
    $region57: #{meter_validator_forward.1} parent=1 // pred_check_branch
      %232 = sbr.rel (0) target = $region59
    $region58: #{meter_validator_forward.1} parent=1 // pred_region
      _
    $region59: #{meter_validator_forward.1} parent=1 // pred_fallthru
      _
    // Predicated region
    $region60: #{meter_validator_forward.1} parent=1 // pred_check
      _
    $region61: #{meter_validator_forward.1} parent=1 // pred_check_branch
      %234 = sbr.rel (0) target = $region63
    $region62: #{meter_validator_forward.1} parent=1 // pred_region
      %235 = dma.done [#allocation4], 128
    $region63: #{meter_validator_forward.1} parent=1 // pred_fallthru
      _
    // Predicated region
    $region64: #{meter_validator_forward.1} parent=1 // pred_check
      _
    $region65: #{meter_validator_forward.1} parent=1 // pred_check_branch
      %237 = sbr.rel (0) target = $region67
    $region66: #{meter_validator_forward.1} parent=1 // pred_region
      _
    $region67: #{meter_validator_forward.1} parent=1 // pred_fallthru
      _
    %238 = vsyncpa [#allocation4], 1

</llo_original>
